<compile_context>
chip_gen: v5e
topology: v5e:2x2
jax: 0.10.0
libtpu: 0.0.40
codegen_flags: <defaults>
</compile_context>

<pallas_src>
import functools

import jax
import jax.numpy as jnp
from jax.experimental import pallas as pl
from jax.experimental.pallas import tpu as pltpu

NEG_SLOPE = 0.01  # torch.nn.LeakyReLU default negative_slope


def _round_up(n, m):
    return ((n + m - 1) // m) * m


def _leaky_relu(x):
    # max-form: one VALU op cheaper per element than where(x > 0, x, s*x).
    return jnp.maximum(x, NEG_SLOPE * x)


def mlp_kernel(x_ref, w1_ref, b1_ref, w2_ref, b2_ref, w3_ref, b3_ref, o_ref,
               *, compute_dtype):
    # x_ref: [Fin, bm]  (features on sublanes, batch on lanes)
    # w1: [H1, Fin] f32, b1: [H1, 1] f32
    # w2: [H2, H1] (f32/bf16), b2: [H2, 1] f32
    # w3: [1,  H2] (f32/bf16), b3: [1, 1] f32 scalar in SMEM
    # o_ref: [1, bm] f32 (lane-dense output row)
    x = x_ref[...]
    w1 = w1_ref[...]
    fin = x.shape[0]

    # Layer 1: K == 2 -> broadcast FMAs on the VPU (skip a degenerate MXU
    # matmul).  Bias is folded into the first FMA.
    h = w1[:, 0:1] * x[0:1, :] + b1_ref[...]
    for f in range(1, fin):                       # static trip count, unrolled
        h = h + w1[:, f:f + 1] * x[f:f + 1, :]
    h = _leaky_relu(h).astype(compute_dtype)      # [H1, bm]

    # Layer 2: the one real matmul on the MXU; batch stays on lanes.
    h = jnp.dot(w2_ref[...], h, preferred_element_type=jnp.float32)
    h = _leaky_relu(h + b2_ref[...]).astype(compute_dtype)   # [H2, bm]

    # Layer 3: [1,H2] x [H2,bm] -> lane-dense [1,bm] row; bias is an SMEM scalar.
    out = jnp.dot(w3_ref[...], h, preferred_element_type=jnp.float32)
    o_ref[...] = (out + b3_ref[0, 0]).astype(o_ref.dtype)


def _default_compute_dtype():
    """bf16 intermediates for the MXU on v6e/v7x; f32 on v5e / unknown."""
    try:
        kind = jax.devices()[0].device_kind.lower()
    except Exception:
        return jnp.float32
    if "v6" in kind or "v7" in kind:
        return jnp.bfloat16
    return jnp.float32


def multiplication_nn_forward(x, params, *, bm=8192, compute_dtype=None):
    """x: [B, 2] float32. params are torch-layout (w: [out, in], b: [out, 1]).
    Returns [B, 1] float32."""
    w1, b1, w2, b2, w3, b3 = params
    B, Fin = x.shape
    H1, H2, Out = w1.shape[0], w2.shape[0], w3.shape[0]

    if compute_dtype is None:
        compute_dtype = _default_compute_dtype()

    # MXU-side weights in the compute dtype (tiny arrays; cast once outside the
    # grid loop).  Layer-1 weights/biases stay f32 (layer 1 runs on the VPU).
    w2c = w2.astype(compute_dtype)
    w3c = w3.astype(compute_dtype)

    # Batch tile: multiple of 128 lanes, capped at the padded batch so tiny
    # batches don't over-allocate.  8192 keeps per-tile VMEM at a few MiB
    # while amortizing the per-grid-step overhead on all generations.
    bm = max(128, min(int(bm), _round_up(B, 128)))
    bm = _round_up(bm, 128)
    B_pad = _round_up(B, bm)
    num_tiles = B_pad // bm

    if B_pad != B:
        x = jnp.pad(x, ((0, B_pad - B), (0, 0)))
    # Put the batch on the lane axis (kept in the wrapper: an in-kernel thin
    # (bm,2)->(2,bm) transpose risks unsupported Mosaic lowering).
    xT = x.T  # [Fin, B_pad]

    full = lambda shape: pl.BlockSpec(shape, lambda i: (0, 0))

    out = pl.pallas_call(
        functools.partial(mlp_kernel, compute_dtype=compute_dtype),
        out_shape=jax.ShapeDtypeStruct((Out, B_pad), jnp.float32),
        grid_spec=pltpu.PrefetchScalarGridSpec(
            num_scalar_prefetch=0,
            grid=(num_tiles,),
            in_specs=[
                pl.BlockSpec((Fin, bm), lambda i: (0, i)),          # x tile
                full((H1, Fin)),                                    # w1 (f32)
                full((H1, 1)),                                      # b1 (f32)
                full((H2, H1)),                                     # w2
                full((H2, 1)),                                      # b2 (f32)
                full((Out, H2)),                                    # w3
                pl.BlockSpec(memory_space=pltpu.MemorySpace.SMEM),  # b3 scalar
            ],
            out_specs=pl.BlockSpec((Out, bm), lambda i: (0, i)),    # lane-dense
        ),
        compiler_params=pltpu.CompilerParams(
            # Independent batch tiles -> megacore parts (v7x) may split the
            # grid across TensorCores; harmless on single-TC chips.
            dimension_semantics=("parallel",),
        ),
    )(xT, w1, b1, w2c, b2, w3c, b3)

    # Lane-dense row -> the module's [B, 1] output shape.  Callers that can
    # consume the flat row should use out[0, :B] directly and skip this copy.
    return out[0, :B].reshape(B, 1)


def init_params(key):
    """PyTorch-style init: U(-1/sqrt(fan_in), 1/sqrt(fan_in)), torch layout."""
    def linear(key, fan_in, fan_out):
        kw, kb = jax.random.split(key)
        bound = 1.0 / jnp.sqrt(jnp.float32(fan_in))
        w = jax.random.uniform(kw, (fan_out, fan_in), jnp.float32, -bound, bound)
        b = jax.random.uniform(kb, (fan_out, 1), jnp.float32, -bound, bound)
        return w, b

    k1, k2, k3 = jax.random.split(key, 3)
    w1, b1 = linear(k1, 2, 50)
    w2, b2 = linear(k2, 50, 50)
    w3, b3 = linear(k3, 50, 1)
    return (w1, b1, w2, b2, w3, b3)


def reference_forward(x, params):
    w1, b1, w2, b2, w3, b3 = params
    h1 = jax.nn.leaky_relu(x @ w1.T + b1.T, NEG_SLOPE)
    h2 = jax.nn.leaky_relu(h1 @ w2.T + b2.T, NEG_SLOPE)
    return h2 @ w3.T + b3.T


if __name__ == "__main__":
    key = jax.random.PRNGKey(0)
    kx, kp = jax.random.split(key)
    params = init_params(kp)

    cdtype = _default_compute_dtype()
    tol = 1e-4 if cdtype == jnp.float32 else 5e-2  # bf16 MXU inputs -> looser

    # Small shape implied by the module: a batch of [B, 2] inputs.
    B = 8
    x = jax.random.normal(kx, (B, 2), dtype=jnp.float32)
    out = jax.block_until_ready(multiplication_nn_forward(x, params))
    ref = reference_forward(x, params)
    assert out.shape == (B, 1)
    assert jnp.allclose(out, ref, atol=tol, rtol=tol), "mismatch vs reference (B=8)"

    # Second check: non-multiple batch + multi-tile grid (padding path).
    B2 = 300
    x2 = jax.random.normal(jax.random.PRNGKey(1), (B2, 2), dtype=jnp.float32)
    out2 = jax.block_until_ready(multiplication_nn_forward(x2, params, bm=128))
    ref2 = reference_forward(x2, params)
    assert out2.shape == (B2, 1)
    assert jnp.allclose(out2, ref2, atol=tol, rtol=tol), "mismatch vs reference (B=300)"

    print("KERNEL_OK")
</pallas_src>

<mosaic_0001>
module attributes {stable_mosaic.version = 11 : i64} {
  func.func @mlp_kernel(%arg0: i32, %arg1: memref<2x128xf32, #tpu.memory_space<vmem>>, %arg2: memref<50x2xf32, #tpu.memory_space<vmem>>, %arg3: memref<50x1xf32, #tpu.memory_space<vmem>>, %arg4: memref<50x50xf32, #tpu.memory_space<vmem>>, %arg5: memref<50x1xf32, #tpu.memory_space<vmem>>, %arg6: memref<1x50xf32, #tpu.memory_space<vmem>>, %arg7: memref<1x1xf32, #tpu.memory_space<smem>>, %arg8: memref<1x128xf32, #tpu.memory_space<vmem>>) attributes {dimension_semantics = [#tpu.dimension_semantics<parallel>], iteration_bounds = array<i64: 1>, scalar_prefetch = 0 : i64, scratch_operands = 0 : i64, tpu.core_type = #tpu.core_type<tc>, window_params = [{transform_indices = @transform_0, window_bounds = array<i64: 2, 128>}, {pipeline_mode = #tpu.pipeline_mode<synchronous>, transform_indices = @transform_1, window_bounds = array<i64: 50, 2>}, {pipeline_mode = #tpu.pipeline_mode<synchronous>, transform_indices = @transform_2, window_bounds = array<i64: 50, 1>}, {pipeline_mode = #tpu.pipeline_mode<synchronous>, transform_indices = @transform_3, window_bounds = array<i64: 50, 50>}, {pipeline_mode = #tpu.pipeline_mode<synchronous>, transform_indices = @transform_4, window_bounds = array<i64: 50, 1>}, {pipeline_mode = #tpu.pipeline_mode<synchronous>, transform_indices = @transform_5, window_bounds = array<i64: 1, 50>}, {transform_indices = @transform_6, window_bounds = array<i64: 1, 1>}, {transform_indices = @transform_7, window_bounds = array<i64: 1, 128>}]} {
    %c0 = arith.constant 0 : index
    %c0_0 = arith.constant 0 : index
    %0 = vector.load %arg1[%c0, %c0_0] : memref<2x128xf32, #tpu.memory_space<vmem>>, vector<2x128xf32>
    %c0_1 = arith.constant 0 : index
    %c0_2 = arith.constant 0 : index
    %1 = vector.load %arg2[%c0_1, %c0_2] : memref<50x2xf32, #tpu.memory_space<vmem>>, vector<50x2xf32>
    %2 = vector.extract_strided_slice %1 {offsets = [0, 0], sizes = [50, 1], strides = [1, 1]} : vector<50x2xf32> to vector<50x1xf32>
    %3 = vector.extract_strided_slice %0 {offsets = [0, 0], sizes = [1, 128], strides = [1, 1]} : vector<2x128xf32> to vector<1x128xf32>
    %4 = vector.broadcast %2 : vector<50x1xf32> to vector<50x128xf32>
    %5 = vector.broadcast %3 : vector<1x128xf32> to vector<50x128xf32>
    %6 = arith.mulf %4, %5 : vector<50x128xf32>
    %c0_3 = arith.constant 0 : index
    %c0_4 = arith.constant 0 : index
    %7 = vector.load %arg3[%c0_3, %c0_4] : memref<50x1xf32, #tpu.memory_space<vmem>>, vector<50x1xf32>
    %8 = vector.broadcast %7 : vector<50x1xf32> to vector<50x128xf32>
    %9 = arith.addf %6, %8 : vector<50x128xf32>
    %10 = vector.extract_strided_slice %1 {offsets = [0, 1], sizes = [50, 1], strides = [1, 1]} : vector<50x2xf32> to vector<50x1xf32>
    %11 = vector.extract_strided_slice %0 {offsets = [1, 0], sizes = [1, 128], strides = [1, 1]} : vector<2x128xf32> to vector<1x128xf32>
    %12 = vector.broadcast %10 : vector<50x1xf32> to vector<50x128xf32>
    %13 = vector.broadcast %11 : vector<1x128xf32> to vector<50x128xf32>
    %14 = arith.mulf %12, %13 : vector<50x128xf32>
    %15 = arith.addf %9, %14 : vector<50x128xf32>
    %cst = arith.constant 0.00999999977 : f32
    %16 = vector.broadcast %cst : f32 to vector<50x128xf32>
    %17 = arith.mulf %16, %15 : vector<50x128xf32>
    %18 = arith.maximumf %15, %17 : vector<50x128xf32>
    %c0_5 = arith.constant 0 : index
    %c0_6 = arith.constant 0 : index
    %19 = vector.load %arg4[%c0_5, %c0_6] : memref<50x50xf32, #tpu.memory_space<vmem>>, vector<50x50xf32>
    %cst_7 = arith.constant dense<0.000000e+00> : vector<50x128xf32>
    %20 = tpu.matmul %19, %18, %cst_7 {dimension_numbers = #tpu.dot_dimension_numbers<[1], [0], [0], [1], [0, 0, 1, 1], [], []>} : vector<50x50xf32>, vector<50x128xf32>, vector<50x128xf32> -> vector<50x128xf32>
    %c0_8 = arith.constant 0 : index
    %c0_9 = arith.constant 0 : index
    %21 = vector.load %arg5[%c0_8, %c0_9] : memref<50x1xf32, #tpu.memory_space<vmem>>, vector<50x1xf32>
    %22 = vector.broadcast %21 : vector<50x1xf32> to vector<50x128xf32>
    %23 = arith.addf %20, %22 : vector<50x128xf32>
    %cst_10 = arith.constant 0.00999999977 : f32
    %24 = vector.broadcast %cst_10 : f32 to vector<50x128xf32>
    %25 = arith.mulf %24, %23 : vector<50x128xf32>
    %26 = arith.maximumf %23, %25 : vector<50x128xf32>
    %c0_11 = arith.constant 0 : index
    %c0_12 = arith.constant 0 : index
    %27 = vector.load %arg6[%c0_11, %c0_12] : memref<1x50xf32, #tpu.memory_space<vmem>>, vector<1x50xf32>
    %cst_13 = arith.constant dense<0.000000e+00> : vector<1x128xf32>
    %28 = tpu.matmul %27, %26, %cst_13 {dimension_numbers = #tpu.dot_dimension_numbers<[1], [0], [0], [1], [0, 0, 1, 1], [], []>} : vector<1x50xf32>, vector<50x128xf32>, vector<1x128xf32> -> vector<1x128xf32>
    %c0_14 = arith.constant 0 : index
    %c0_15 = arith.constant 0 : index
    %29 = memref.load %arg7[%c0_14, %c0_15] : memref<1x1xf32, #tpu.memory_space<smem>>
    %30 = vector.broadcast %29 : f32 to vector<1x128xf32>
    %31 = arith.addf %28, %30 : vector<1x128xf32>
    %c0_16 = arith.constant 0 : index
    %c0_17 = arith.constant 0 : index
    %32 = vector.load %arg8[%c0_16, %c0_17] : memref<1x128xf32, #tpu.memory_space<vmem>>, vector<1x128xf32>
    tpu.vector_store %arg8[%c0_16, %c0_17], %31 {strides = array<i32>} : memref<1x128xf32, #tpu.memory_space<vmem>>, vector<1x128xf32>,
    return
  }
  func.func @transform_0(%arg0: i32) -> (i32, i32) {
    %c0_i32 = arith.constant 0 : i32
    %c0_i32_0 = arith.constant 0 : i32
    return %c0_i32, %arg0 : i32, i32
  }
  func.func @transform_1(%arg0: i32) -> (i32, i32) {
    %c0_i32 = arith.constant 0 : i32
    %c0_i32_0 = arith.constant 0 : i32
    %c0_i32_1 = arith.constant 0 : i32
    return %c0_i32, %c0_i32_0 : i32, i32
  }
  func.func @transform_2(%arg0: i32) -> (i32, i32) {
    %c0_i32 = arith.constant 0 : i32
    %c0_i32_0 = arith.constant 0 : i32
    %c0_i32_1 = arith.constant 0 : i32
    return %c0_i32, %c0_i32_0 : i32, i32
  }
  func.func @transform_3(%arg0: i32) -> (i32, i32) {
    %c0_i32 = arith.constant 0 : i32
    %c0_i32_0 = arith.constant 0 : i32
    %c0_i32_1 = arith.constant 0 : i32
    return %c0_i32, %c0_i32_0 : i32, i32
  }
  func.func @transform_4(%arg0: i32) -> (i32, i32) {
    %c0_i32 = arith.constant 0 : i32
    %c0_i32_0 = arith.constant 0 : i32
    %c0_i32_1 = arith.constant 0 : i32
    return %c0_i32, %c0_i32_0 : i32, i32
  }
  func.func @transform_5(%arg0: i32) -> (i32, i32) {
    %c0_i32 = arith.constant 0 : i32
    %c0_i32_0 = arith.constant 0 : i32
    %c0_i32_1 = arith.constant 0 : i32
    return %c0_i32, %c0_i32_0 : i32, i32
  }
  func.func @transform_6(%arg0: i32) -> (i32, i32) {
    %c0_i32 = arith.constant 0 : i32
    %c0_i32_0 = arith.constant 0 : i32
    %c0_i32_1 = arith.constant 0 : i32
    return %c0_i32, %c0_i32_0 : i32, i32
  }
  func.func @transform_7(%arg0: i32) -> (i32, i32) {
    %c0_i32 = arith.constant 0 : i32
    %c0_i32_0 = arith.constant 0 : i32
    return %c0_i32, %arg0 : i32, i32
  }
}

</mosaic_0001>

<llo_original>
// kernel: tpu_custom_call.1
$region0: #{tpu_custom_call.1}
  #allocation0 [shape = 'u32[]', space=smem, size = 0x4, offset = 0x4, fixed_abs, tag = 'smem constant byte address 0x4 - core index']
  #allocation1 [shape = 'u32[72,128]{1,0:T(1,128)}', space=vmem, size = 0x9000, scoped, tag = 'internal scratch']
  #allocation2 [shape = 'f32[1,1]{1,0:T(1,128)S(6)}', space=smem, size = 0x200, scoped, tag = 'scoped memory for tpu_custom_call.1']
  %s0 = inlined_call_operand.vmem [shape: f32[2,128], index: 0, kind: input, shape index: {}]
  %s1 = inlined_call_operand.vmem [shape: f32[50,2], index: 1, kind: input, shape index: {}]
  %s2 = inlined_call_operand.vmem [shape: f32[50,1], index: 2, kind: input, shape index: {}]
  %s3 = inlined_call_operand.vmem [shape: f32[50,50], index: 3, kind: input, shape index: {}]
  %s4 = inlined_call_operand.vmem [shape: f32[50,1], index: 4, kind: input, shape index: {}]
  %s5 = inlined_call_operand.vmem [shape: f32[1,50], index: 5, kind: input, shape index: {}]
  %s6 = inlined_call_operand.<no memory space> [shape: f32[1,1], index: 6, kind: input, shape index: {}]
  %s7 = inlined_call_operand.hbm [shape: f32[1,128], index: 7, kind: output, shape index: {}]
  %s8 = sld [smem:[#allocation0]]
  $region38: #{tpu_custom_call.1} parent=0
    _
  %s10 = ssub.s32 1, %s8
  %s11 = scalar_select 0, %s10, %s8
  %12 = sst [smem:[#allocation2]] %s6
  $region1: #{tpu_custom_call.1} parent=0
    #allocation3 [shape = 'u8[512]{0}', space=vmem, size = 0x400, scoped, tag = 'output window, operand 0, single buffered']
    #allocation4 [shape = 's32[1]{0}', space=sflag, size = 0x4, scoped, tag = 'scoped memory for tpu_custom_call.1']
    %13 = vsyncpa [#allocation4], 0
    // Predicated region
    $region2: #{tpu_custom_call.1} parent=1 // pred_check
      _
    $region3: #{tpu_custom_call.1} parent=1 // pred_check_branch
      %15 = sbr.rel (0) target = $region5
    $region4: #{tpu_custom_call.1} parent=1 // pred_region
      _
    $region5: #{tpu_custom_call.1} parent=1 // pred_fallthru
      _
    // Predicated region
    $region6: #{tpu_custom_call.1} parent=1 // pred_check
      _
    $region7: #{tpu_custom_call.1} parent=1 // pred_check_branch
      %17 = sbr.rel (0) target = $region9
    $region8: #{tpu_custom_call.1} parent=1 // pred_region
      _
    $region9: #{tpu_custom_call.1} parent=1 // pred_fallthru
      _
    // Predicated region
    $region10: #{tpu_custom_call.1} parent=1 // pred_check
      _
    $region11: #{tpu_custom_call.1} parent=1 // pred_check_branch
      %19 = sbr.rel (0) target = $region13
    $region12: #{tpu_custom_call.1} parent=1 // pred_region
      _
    $region13: #{tpu_custom_call.1} parent=1 // pred_fallthru
      _
    // Predicated region
    $region14: #{tpu_custom_call.1} parent=1 // pred_check
      _
    $region15: #{tpu_custom_call.1} parent=1 // pred_check_branch
      %21 = sbr.rel (0) target = $region17
    $region16: #{tpu_custom_call.1} parent=1 // pred_region
      _
    $region17: #{tpu_custom_call.1} parent=1 // pred_fallthru
      _
    // Predicated region
    $region18: #{tpu_custom_call.1} parent=1 // pred_check
      _
    $region19: #{tpu_custom_call.1} parent=1 // pred_check_branch
      %23 = sbr.rel (0) target = $region21
    $region20: #{tpu_custom_call.1} parent=1 // pred_region
      _
    $region21: #{tpu_custom_call.1} parent=1 // pred_fallthru
      _
    // Predicated region
    $region22: #{tpu_custom_call.1} parent=1 // pred_check
      _
    $region23: #{tpu_custom_call.1} parent=1 // pred_check_branch
      %25 = sbr.rel (0) target = $region25
    $region24: #{tpu_custom_call.1} parent=1 // pred_region
      _
    $region25: #{tpu_custom_call.1} parent=1 // pred_fallthru
      _
    // Predicated region
    $region26: #{tpu_custom_call.1} parent=1 // pred_check
      _
    $region27: #{tpu_custom_call.1} parent=1 // pred_check_branch
      %27 = sbr.rel (0) target = $region29
    $region28: #{tpu_custom_call.1} parent=1 // pred_region
      _
    $region29: #{tpu_custom_call.1} parent=1 // pred_fallthru
      _
    %v28 = vld [vmem:[%s0] sm:$0x3]
    %v29 = vld [vmem:[%s1] sm:$0xff]
    %v30 = vld [vmem:[%s1 + $0x8] sm:$0xff]
    %v31 = vld [vmem:[%s1 + $0x10] sm:$0xff]
    %v32 = vld [vmem:[%s1 + $0x18] sm:$0xff]
    %v33 = vld [vmem:[%s1 + $0x20] sm:$0xff]
    %v34 = vld [vmem:[%s1 + $0x28] sm:$0xff]
    %v35 = vld [vmem:[%s1 + $0x30] sm:$0x3]
    %37 = vset.pattern.permute.xlu0 0
    %38 = vperm.xlu0 %37, %v29
    %v39 = vpop.permute.xlu0 %38
    %42 = vset.pattern.permute.xlu0 0
    %43 = vperm.xlu0 %42, %v30
    %v44 = vpop.permute.xlu0 %43
    %47 = vset.pattern.permute.xlu0 0
    %48 = vperm.xlu0 %47, %v31
    %v49 = vpop.permute.xlu0 %48
    %52 = vset.pattern.permute.xlu0 0
    %53 = vperm.xlu0 %52, %v32
    %v54 = vpop.permute.xlu0 %53
    %57 = vset.pattern.permute.xlu0 0
    %58 = vperm.xlu0 %57, %v33
    %v59 = vpop.permute.xlu0 %58
    %62 = vset.pattern.permute.xlu0 0
    %63 = vperm.xlu0 %62, %v34
    %v64 = vpop.permute.xlu0 %63
    %67 = vset.pattern.permute.xlu0 0
    %68 = vperm.xlu0 %67, %v35
    %v69 = vpop.permute.xlu0 %68
    %v71 = vperm.slane %v28, 0
    %v72 = vmul.f32 %v39, %v71
    %v73 = vmul.f32 %v44, %v71
    %v74 = vmul.f32 %v49, %v71
    %v75 = vmul.f32 %v54, %v71
    %v76 = vmul.f32 %v59, %v71
    %v77 = vmul.f32 %v64, %v71
    %v78 = vmul.f32 %v69, %v71
    %v79 = vld [vmem:[%s2] sm:$0xff]
    %v80 = vld [vmem:[%s2 + $0x8] sm:$0xff]
    %v81 = vld [vmem:[%s2 + $0x10] sm:$0xff]
    %v82 = vld [vmem:[%s2 + $0x18] sm:$0xff]
    %v83 = vld [vmem:[%s2 + $0x20] sm:$0xff]
    %v84 = vld [vmem:[%s2 + $0x28] sm:$0xff]
    %v85 = vld [vmem:[%s2 + $0x30] sm:$0x3]
    %87 = vset.pattern.permute.xlu0 0
    %88 = vperm.xlu0 %87, %v79
    %v89 = vpop.permute.xlu0 %88
    %92 = vset.pattern.permute.xlu0 0
    %93 = vperm.xlu0 %92, %v80
    %v94 = vpop.permute.xlu0 %93
    %97 = vset.pattern.permute.xlu0 0
    %98 = vperm.xlu0 %97, %v81
    %v99 = vpop.permute.xlu0 %98
    %102 = vset.pattern.permute.xlu0 0
    %103 = vperm.xlu0 %102, %v82
    %v104 = vpop.permute.xlu0 %103
    %107 = vset.pattern.permute.xlu0 0
    %108 = vperm.xlu0 %107, %v83
    %v109 = vpop.permute.xlu0 %108
    %112 = vset.pattern.permute.xlu0 0
    %113 = vperm.xlu0 %112, %v84
    %v114 = vpop.permute.xlu0 %113
    %117 = vset.pattern.permute.xlu0 0
    %118 = vperm.xlu0 %117, %v85
    %v119 = vpop.permute.xlu0 %118
    %v121 = vadd.f32 %v72, %v89
    %v122 = vadd.f32 %v73, %v94
    %v123 = vadd.f32 %v74, %v99
    %v124 = vadd.f32 %v75, %v104
    %v125 = vadd.f32 %v76, %v109
    %v126 = vadd.f32 %v77, %v114
    %v127 = vadd.f32 %v78, %v119
    %128 = vset.pattern.permute.xlu0 1
    %129 = vperm.xlu0 %128, %v29
    %v130 = vpop.permute.xlu0 %129
    %132 = vset.pattern.permute.xlu0 1
    %133 = vperm.xlu0 %132, %v30
    %v134 = vpop.permute.xlu0 %133
    %136 = vset.pattern.permute.xlu0 1
    %137 = vperm.xlu0 %136, %v31
    %v138 = vpop.permute.xlu0 %137
    %140 = vset.pattern.permute.xlu0 1
    %141 = vperm.xlu0 %140, %v32
    %v142 = vpop.permute.xlu0 %141
    %144 = vset.pattern.permute.xlu0 1
    %145 = vperm.xlu0 %144, %v33
    %v146 = vpop.permute.xlu0 %145
    %148 = vset.pattern.permute.xlu0 1
    %149 = vperm.xlu0 %148, %v34
    %v150 = vpop.permute.xlu0 %149
    %152 = vset.pattern.permute.xlu0 1
    %153 = vperm.xlu0 %152, %v35
    %v154 = vpop.permute.xlu0 %153
    %v156 = vperm.slane %v28, 1
    %v157 = vmul.f32 %v130, %v156
    %v158 = vmul.f32 %v134, %v156
    %v159 = vmul.f32 %v138, %v156
    %v160 = vmul.f32 %v142, %v156
    %v161 = vmul.f32 %v146, %v156
    %v162 = vmul.f32 %v150, %v156
    %v163 = vmul.f32 %v154, %v156
    %v164 = vadd.f32 %v121, %v157
    %v165 = vadd.f32 %v122, %v158
    %v166 = vadd.f32 %v123, %v159
    %v167 = vadd.f32 %v124, %v160
    %v168 = vadd.f32 %v125, %v161
    %v169 = vadd.f32 %v126, %v162
    %v170 = vadd.f32 %v127, %v163
    %v171 = vmul.f32 %v164, 0.01
    %v172 = vmul.f32 %v165, 0.01
    %v173 = vmul.f32 %v166, 0.01
    %v174 = vmul.f32 %v167, 0.01
    %v175 = vmul.f32 %v168, 0.01
    %v176 = vmul.f32 %v169, 0.01
    %v177 = vmul.f32 %v170, 0.01
    %v178 = vmax.f32 %v164, %v171
    %v179 = vmax.f32 %v165, %v172
    %v180 = vmax.f32 %v166, %v173
    %v181 = vmax.f32 %v167, %v174
    %v182 = vmax.f32 %v168, %v175
    %v183 = vmax.f32 %v169, %v176
    %v184 = vmax.f32 %v170, %v177
    %v185 = vld [vmem:[%s3] sm:$0xff]
    %v186 = vld [vmem:[%s3 + $0x8] sm:$0xff]
    %v187 = vld [vmem:[%s3 + $0x10] sm:$0xff]
    %v188 = vld [vmem:[%s3 + $0x18] sm:$0xff]
    %v189 = vld [vmem:[%s3 + $0x20] sm:$0xff]
    %v190 = vld [vmem:[%s3 + $0x28] sm:$0xff]
    %v191 = vld [vmem:[%s3 + $0x30] sm:$0x3]
    %v192 = vld [vmem:[%s4] sm:$0xff]
    %v193 = vld [vmem:[%s4 + $0x8] sm:$0xff]
    %v194 = vld [vmem:[%s4 + $0x10] sm:$0xff]
    %v195 = vld [vmem:[%s4 + $0x18] sm:$0xff]
    %v196 = vld [vmem:[%s4 + $0x20] sm:$0xff]
    %v197 = vld [vmem:[%s4 + $0x28] sm:$0xff]
    %v198 = vld [vmem:[%s4 + $0x30] sm:$0x3]
    %200 = vset.pattern.permute.xlu0 0
    %201 = vperm.xlu0 %200, %v192
    %v202 = vpop.permute.xlu0 %201
    %205 = vset.pattern.permute.xlu0 0
    %206 = vperm.xlu0 %205, %v193
    %v207 = vpop.permute.xlu0 %206
    %210 = vset.pattern.permute.xlu0 0
    %211 = vperm.xlu0 %210, %v194
    %v212 = vpop.permute.xlu0 %211
    %215 = vset.pattern.permute.xlu0 0
    %216 = vperm.xlu0 %215, %v195
    %v217 = vpop.permute.xlu0 %216
    %220 = vset.pattern.permute.xlu0 0
    %221 = vperm.xlu0 %220, %v196
    %v222 = vpop.permute.xlu0 %221
    %225 = vset.pattern.permute.xlu0 0
    %226 = vperm.xlu0 %225, %v197
    %v227 = vpop.permute.xlu0 %226
    %230 = vset.pattern.permute.xlu0 0
    %231 = vperm.xlu0 %230, %v198
    %v232 = vpop.permute.xlu0 %231
    %vm234 = vcmask 408576
    %v236 = vsel %vm234, %v185, 0
    %v239 = vsel %vm234, %v186, 0
    %v242 = vsel %vm234, %v187, 0
    %v245 = vsel %vm234, %v188, 0
    %v248 = vsel %vm234, %v189, 0
    %v251 = vsel %vm234, %v190, 0
    %v254 = vsel %vm234, %v191, 0
    %vm256 = vcmask 1041408
    %v258 = vsel %vm256, %v184, 0
    %260 = vmatpush.msra.mxu0 0.0
    %261 = vmatpush.msra.mxu0 0.0
    %262 = vmatpush.msra.mxu0 0.0
    %263 = vmatpush.msra.mxu0 0.0
    %264 = vmatpush.msra.mxu0 0.0
    %265 = vmatpush.msra.mxu0 0.0
    %266 = vmatpush.msra.mxu0 0.0
    %267 = vmatpush.msra.mxu0 0.0
    %268 = vmatpush.msra.mxu0 0.0
    %269 = vmatpush.msra.mxu0 %v258
    %270 = vmatpush.msra.mxu0 %v183
    %271 = vmatpush.msra.mxu0 %v182
    %272 = vmatpush.msra.mxu0 %v181
    %273 = vmatpush.msra.mxu0 %v180
    %274 = vmatpush.msra.mxu0 %v179
    %275 = vmatpush.msra.mxu0 %v178
    %276 = vmatmul.f32.gmra.mxu0 %v236
    %v277 = vpop.f32.mrf.mxu0
    %v278 = vadd.f32 %v202, %v277
    %279 = vmatmul.f32.gmra.mxu0 %v239
    %v280 = vpop.f32.mrf.mxu0
    %v281 = vadd.f32 %v207, %v280
    %282 = vmatmul.f32.gmra.mxu0 %v242
    %v283 = vpop.f32.mrf.mxu0
    %v284 = vadd.f32 %v212, %v283
    %285 = vmatmul.f32.gmra.mxu0 %v245
    %v286 = vpop.f32.mrf.mxu0
    %v287 = vadd.f32 %v217, %v286
    %288 = vmatmul.f32.gmra.mxu0 %v248
    %v289 = vpop.f32.mrf.mxu0
    %v290 = vadd.f32 %v222, %v289
    %291 = vmatmul.f32.gmra.mxu0 %v251
    %v292 = vpop.f32.mrf.mxu0
    %v293 = vadd.f32 %v227, %v292
    %294 = vmatmul.f32.gmra.mxu0 %v254
    %v295 = vpop.f32.mrf.mxu0
    %v296 = vadd.f32 %v232, %v295
    %297 = vdwg.mxu0
    %v298 = vmul.f32 %v278, 0.01
    %v299 = vmul.f32 %v281, 0.01
    %v300 = vmul.f32 %v284, 0.01
    %v301 = vmul.f32 %v287, 0.01
    %v302 = vmul.f32 %v290, 0.01
    %v303 = vmul.f32 %v293, 0.01
    %v304 = vmul.f32 %v296, 0.01
    %v305 = vmax.f32 %v278, %v298
    %v306 = vmax.f32 %v281, %v299
    %v307 = vmax.f32 %v284, %v300
    %v308 = vmax.f32 %v287, %v301
    %v309 = vmax.f32 %v290, %v302
    %v310 = vmax.f32 %v293, %v303
    %v311 = vmax.f32 %v296, %v304
    %v312 = vld [vmem:[%s5] sm:$0x1]
    %s313 = sld [smem:[#allocation2]]
    %v314 = vstv %s313
    %v316 = vsel %vm234, %v312, 0
    %v319 = vsel %vm256, %v311, 0
    %321 = vmatpush.msra.mxu0 0.0
    %322 = vmatpush.msra.mxu0 0.0
    %323 = vmatpush.msra.mxu0 0.0
    %324 = vmatpush.msra.mxu0 0.0
    %325 = vmatpush.msra.mxu0 0.0
    %326 = vmatpush.msra.mxu0 0.0
    %327 = vmatpush.msra.mxu0 0.0
    %328 = vmatpush.msra.mxu0 0.0
    %329 = vmatpush.msra.mxu0 0.0
    %330 = vmatpush.msra.mxu0 %v319
    %331 = vmatpush.msra.mxu0 %v310
    %332 = vmatpush.msra.mxu0 %v309
    %333 = vmatpush.msra.mxu0 %v308
    %334 = vmatpush.msra.mxu0 %v307
    %335 = vmatpush.msra.mxu0 %v306
    %336 = vmatpush.msra.mxu0 %v305
    %337 = vmatmul.f32.gmra.mxu0 %v316
    %v338 = vpop.f32.mrf.mxu0
    %v339 = vadd.f32 %v314, %v338
    %340 = vdwg.mxu0
    %341 = vst [vmem:[#allocation3] sm:$0x1] %v339
    // Predicated region
    $region30: #{tpu_custom_call.1} parent=1 // pred_check
      _
    $region31: #{tpu_custom_call.1} parent=1 // pred_check_branch
      %343 = sbr.rel (0) target = $region33
    $region32: #{tpu_custom_call.1} parent=1 // pred_region
      %345 = vsyncadd [#allocation4], 0
      %s347 = sshll.u32 [#allocation3], 4
      %s348 = int_to_ptr.vmem [resolvable:$true] %s347
      %s349 = sshll.u32 %s7, 4
      %s350 = int_to_ptr.hbm [resolvable:$true] %s349
      %352 = dma.vmem_to_hbm [thread:$0]  %s348, 16, %s350, [#allocation4]
    $region33: #{tpu_custom_call.1} parent=1 // pred_fallthru
      _
    // Predicated region
    $region34: #{tpu_custom_call.1} parent=1 // pred_check
      _
    $region35: #{tpu_custom_call.1} parent=1 // pred_check_branch
      %354 = sbr.rel (0) target = $region37
    $region36: #{tpu_custom_call.1} parent=1 // pred_region
      %356 = dma.done [#allocation4], 16
    $region37: #{tpu_custom_call.1} parent=1 // pred_fallthru
      _
    %357 = vsyncpa [#allocation4], 1

</llo_original>
